<compile_context>
chip_gen: v5e
topology: v5e:2x2
jax: 0.10.0
libtpu: 0.0.40
codegen_flags: <defaults>
</compile_context>

<pallas_src>
import jax
import jax.numpy as jnp
from jax.experimental import pallas as pl
from jax.experimental.pallas import tpu as pltpu

_MIB = 1024 * 1024


# ----------------------------------------------------------------------------
# Glue: deterministic relative-position index matrix (N x N int32)
# ----------------------------------------------------------------------------
def generate_relative_position_index(patch_grid_hw):
    grid_h, grid_w = patch_grid_hw
    num_tokens = grid_h * grid_w + 1

    ys = jnp.arange(grid_h, dtype=jnp.int32)
    xs = jnp.arange(grid_w, dtype=jnp.int32)
    yy, xx = jnp.meshgrid(ys, xs, indexing="ij")
    coords_flat = jnp.stack([yy, xx]).reshape(2, -1)                  # (2, HW)

    rel = coords_flat[:, :, None] - coords_flat[:, None, :]           # (2, HW, HW)
    rel = jnp.transpose(rel, (1, 2, 0))                               # (HW, HW, 2)
    rel = rel.at[:, :, 0].add(grid_h - 1)
    rel = rel.at[:, :, 0].multiply(2 * grid_w - 1)
    rel = rel.at[:, :, 1].add(grid_w - 1)

    max_token_index = (2 * grid_h - 1) * (2 * grid_w - 1) - 1
    cls_to_token_index = max_token_index + 1
    token_to_cls_index = max_token_index + 2
    cls_to_cls_index = max_token_index + 3

    idx = jnp.zeros((num_tokens, num_tokens), dtype=jnp.int32)
    idx = idx.at[1:, 1:].set(rel.sum(-1).astype(jnp.int32))
    idx = idx.at[0, :].set(cls_to_token_index)
    idx = idx.at[:, 0].set(token_to_cls_index)
    idx = idx.at[0, 0].set(cls_to_cls_index)
    return idx


# ----------------------------------------------------------------------------
# Glue: bilinear interpolation of the reference LUT to the target grid size.
# TODO(synk): jax.image.resize(bilinear, antialias=False) matches torch
#   F.interpolate(mode='bilinear', align_corners=False) conventions; edge rows/cols
#   should be spot-checked if bit-exact PyTorch parity is required.
# ----------------------------------------------------------------------------
def generate_position_bias_lut(ref_bias_lut, num_heads, ref_grid_hw, patch_grid_hw):
    ref_h, ref_w = ref_grid_hw
    ref_rel_h, ref_rel_w = 2 * ref_h - 1, 2 * ref_w - 1
    new_rel_h, new_rel_w = 2 * patch_grid_hw[0] - 1, 2 * patch_grid_hw[1] - 1
    ref_num_token_entries = ref_rel_h * ref_rel_w

    ref_token_lut = ref_bias_lut[:ref_num_token_entries, :]           # (ref_rel_h*ref_rel_w, H)
    ref_cls_lut = ref_bias_lut[ref_num_token_entries:, :]             # (3, H)

    ref_token_2d = ref_token_lut.reshape(ref_rel_h, ref_rel_w, num_heads)
    new_token_2d = jax.image.resize(
        ref_token_2d, (new_rel_h, new_rel_w, num_heads),
        method="bilinear", antialias=False)
    new_token_lut = new_token_2d.reshape(new_rel_h * new_rel_w, num_heads)

    return jnp.concatenate([new_token_lut, ref_cls_lut], axis=0)      # (L, H)


# ----------------------------------------------------------------------------
# Glue: (H, N, N) bias precompute — cache me per grid size (GridCache equivalent).
# ----------------------------------------------------------------------------
def precompute_position_bias(ref_bias_lut, num_heads, patch_grid_hw,
                             reference_patch_grid_hw=(32, 32)):
    lut_lh = generate_position_bias_lut(
        ref_bias_lut, num_heads, reference_patch_grid_hw, patch_grid_hw)  # (L, H)
    relpos_index = generate_relative_position_index(patch_grid_hw)        # (N, N)
    num_tokens = relpos_index.shape[0]
    # Gather directly in (H, N*N) layout -> avoids a large (N,N,H)->(H,N,N) transpose.
    bias_h_nn = jnp.take(lut_lh.T, relpos_index.reshape(-1), axis=1)      # (H, N*N)
    return bias_h_nn.reshape(num_heads, num_tokens, num_tokens)           # (H, N, N)


# ----------------------------------------------------------------------------
# VMEM budgeting (generation-aware) and tile selection
# ----------------------------------------------------------------------------
def _vmem_capacity_bytes():
    """Physical VMEM per core; conservative 64 MiB (v7x) fallback if unavailable."""
    try:
        cap = int(getattr(pltpu.get_tpu_info(), "vmem_capacity_bytes", 0))
        if cap > 0:
            return cap
    except Exception:
        pass
    return 64 * _MIB


def _vmem_budgets():
    cap = _vmem_capacity_bytes()
    # 2 blocked inputs + 1 output, each double-buffered -> resident ~= 6 x tile.
    working_set = min(cap // 4, 30 * _MIB)        # ~30 MiB v5e/v6e, ~16 MiB v7x
    tile_budget = working_set // 6
    vmem_limit = int(min(cap // 2, max(2 * working_set, 32 * _MIB)))
    return tile_budget, vmem_limit


def _round_up(x, m):
    return (x + m - 1) // m * m


def _head_block_candidates(num_heads):
    """Head-block sizes keeping the second-to-last block dim a multiple of 8 or the
    full head extent, in descending order."""
    cands = {num_heads}
    for hb in range(8, num_heads, 8):
        if num_heads % hb == 0:
            cands.add(hb)
    return sorted(cands, reverse=True)


def _pick_tiles(num_heads, flat_len, itemsize, tile_budget, batch):
    per_head_bytes = flat_len * itemsize
    cands = _head_block_candidates(num_heads)

    hb, chunk = None, flat_len
    for cand in cands:  # largest head block whose full-(N*N) tile fits the budget
        if cand * per_head_bytes <= tile_budget:
            hb, chunk = cand, flat_len
            break
    if hb is None:
        # Per-head slab too big (large N): keep the smallest "nice" head block and
        # add a lane-chunk axis (multiple of 128 -> lane-dense unmasked stores).
        hb = cands[-1]
        chunk = max(128, (tile_budget // (hb * itemsize)) // 128 * 128)
        chunk = min(chunk, _round_up(flat_len, 128))

    # Make sure the (all-parallel) grid has >= 2 steps so both v7x TCs get work.
    if (num_heads // hb) * pl.cdiv(flat_len, chunk) * batch < 2:
        smaller = [c for c in cands if c < hb]
        if smaller:
            hb = smaller[0]
        elif chunk >= 256:
            chunk = max(128, _round_up(pl.cdiv(chunk, 2), 128))
    return hb, chunk


# ----------------------------------------------------------------------------
# Pallas kernel: lane-dense streaming add  out[b, h, c] = attn[b, h, c] + bias[h, c]
# ----------------------------------------------------------------------------
def _relpos_add_kernel(bias_ref, attn_ref, out_ref):
    # All refs are (HB, C) lane-dense tiles; pure VPU streaming add.
    out_ref[...] = attn_ref[...] + bias_ref[...]


def relpos_encode(attention_tensor, bias_hnn, *, tile_budget_bytes=None):
    """attention_tensor: (B, H, N, N); bias_hnn: (H, N, N).  Returns attn + bias."""
    B, H, N, _ = attention_tensor.shape
    NN = N * N
    dtype = attention_tensor.dtype
    itemsize = jnp.dtype(dtype).itemsize

    # Lane-dense layouts; keep everything in the attention dtype (bf16 stays bf16).
    attn_flat = attention_tensor.reshape(B, H, NN)
    bias_flat = bias_hnn.astype(dtype).reshape(H, NN)

    auto_tile_budget, vmem_limit = _vmem_budgets()
    tile_budget = auto_tile_budget if tile_budget_bytes is None else tile_budget_bytes
    HB, C = _pick_tiles(H, NN, itemsize, tile_budget, B)
    NC = pl.cdiv(NN, C)

    cost = pl.CostEstimate(
        flops=B * H * NN,
        transcendentals=0,
        bytes_accessed=(2 * B * H + H) * NN * itemsize,
    )

    out_flat = pl.pallas_call(
        _relpos_add_kernel,
        out_shape=jax.ShapeDtypeStruct((B, H, NN), dtype),
        grid=(H // HB, NC, B),                    # batch innermost: bias block reused
        in_specs=[
            pl.BlockSpec((HB, C), lambda h, c, b: (h, c)),          # bias (no b dep)
            pl.BlockSpec((None, HB, C), lambda h, c, b: (b, h, c)),
        ],
        out_specs=pl.BlockSpec((None, HB, C), lambda h, c, b: (b, h, c)),
        input_output_aliases={1: 0},              # in-place add into the attn buffer
        cost_estimate=cost,
        compiler_params=pltpu.CompilerParams(
            dimension_semantics=("parallel", "parallel", "parallel"),
            vmem_limit_bytes=vmem_limit,
        ),
    )(bias_flat, attn_flat)

    return out_flat.reshape(B, H, N, N)


# ----------------------------------------------------------------------------
# Module-equivalent wrapper (forward pass)
# ----------------------------------------------------------------------------
def relative_position_encoding_forward(attention_tensor, patch_grid_hw, ref_bias_lut,
                                       num_heads, reference_patch_grid_hw=(32, 32)):
    # NOTE: bias depends only on (weights, patch_grid_hw); real callers should cache
    # the returned bias per grid size (GridCache equivalent) instead of recomputing.
    bias_hnn = precompute_position_bias(
        ref_bias_lut, num_heads, patch_grid_hw, reference_patch_grid_hw)
    return relpos_encode(attention_tensor, bias_hnn), bias_hnn


if __name__ == "__main__":
    # Small, module-consistent shapes.
    num_heads = 4
    reference_patch_grid_hw = (32, 32)          # module default
    patch_grid_hw = (8, 8)                      # dynamic target grid
    grid_h, grid_w = patch_grid_hw
    num_tokens = grid_h * grid_w + 1            # 65
    batch = 2

    key = jax.random.PRNGKey(0)
    k_lut, k_attn = jax.random.split(key)

    # Deterministic "learned" reference LUT (torch init is zeros; use randn so the
    # test is non-trivial).
    ref_rel_h = 2 * reference_patch_grid_hw[0] - 1
    ref_rel_w = 2 * reference_patch_grid_hw[1] - 1
    ref_lut_len = ref_rel_h * ref_rel_w + 3
    ref_bias_lut = 0.02 * jax.random.normal(k_lut, (ref_lut_len, num_heads), jnp.float32)

    attention_tensor = jax.random.normal(
        k_attn, (batch, num_heads, num_tokens, num_tokens), jnp.float32)

    # Bias precompute: done once here and reused (cached per grid size in a model).
    bias_hnn = precompute_position_bias(
        ref_bias_lut, num_heads, patch_grid_hw, reference_patch_grid_hw)

    # Pure-JAX reference (computed before the kernel: the kernel aliases attn->out).
    expected_f32 = attention_tensor + bias_hnn[None]

    # 1) f32, default tiling (full N*N lane extent).
    out = jax.block_until_ready(relpos_encode(attention_tensor, bias_hnn))
    assert out.shape == attention_tensor.shape and out.dtype == attention_tensor.dtype
    assert jnp.allclose(out, expected_f32, atol=1e-5, rtol=1e-5), "f32 mismatch"

    # 2) bf16 end-to-end (the add runs in the attention dtype; bias cast in wrapper).
    attn_bf16 = attention_tensor.astype(jnp.bfloat16)
    expected_bf16 = (attn_bf16 + bias_hnn[None].astype(jnp.bfloat16)).astype(jnp.float32)
    out_bf16 = jax.block_until_ready(relpos_encode(attn_bf16, bias_hnn))
    assert out_bf16.dtype == jnp.bfloat16
    assert jnp.allclose(out_bf16.astype(jnp.float32), expected_bf16,
                        atol=2e-2, rtol=2e-2), "bf16 mismatch"

    # 3) Force the lane-chunked path (large-N tiling + masked boundary block) via an
    #    artificially small tile budget, and check correctness against the reference.
    out_chunked = jax.block_until_ready(
        relpos_encode(attention_tensor, bias_hnn, tile_budget_bytes=16 * 1024))
    assert jnp.allclose(out_chunked, expected_f32, atol=1e-5, rtol=1e-5), "chunked mismatch"

    print("KERNEL_OK")
</pallas_src>

<mosaic_0001>
module attributes {stable_mosaic.version = 11 : i64} {
  func.func @_relpos_add_kernel(%arg0: i32, %arg1: i32, %arg2: i32, %arg3: memref<4x4225xf32, #tpu.memory_space<vmem>>, %arg4: memref<1x4x4225xf32, #tpu.memory_space<vmem>>, %arg5: memref<1x4x4225xf32, #tpu.memory_space<vmem>>) attributes {dimension_semantics = [#tpu.dimension_semantics<parallel>, #tpu.dimension_semantics<parallel>, #tpu.dimension_semantics<parallel>], iteration_bounds = array<i64: 1, 1, 2>, scalar_prefetch = 0 : i64, scratch_operands = 0 : i64, tpu.core_type = #tpu.core_type<tc>, window_params = [{transform_indices = @transform_0, window_bounds = array<i64: 4, 4225>}, {transform_indices = @transform_1, window_bounds = array<i64: 1, 4, 4225>}, {transform_indices = @transform_2, window_bounds = array<i64: 1, 4, 4225>}]} {
    %c0 = arith.constant 0 : index
    %c0_0 = arith.constant 0 : index
    %c0_1 = arith.constant 0 : index
    %0 = vector.load %arg4[%c0, %c0_0, %c0_1] : memref<1x4x4225xf32, #tpu.memory_space<vmem>>, vector<1x4x4225xf32>
    %1 = vector.shape_cast %0 : vector<1x4x4225xf32> to vector<4x4225xf32>
    %c0_2 = arith.constant 0 : index
    %c0_3 = arith.constant 0 : index
    %2 = vector.load %arg3[%c0_2, %c0_3] : memref<4x4225xf32, #tpu.memory_space<vmem>>, vector<4x4225xf32>
    %3 = arith.addf %1, %2 : vector<4x4225xf32>
    %c0_4 = arith.constant 0 : index
    %c0_5 = arith.constant 0 : index
    %c0_6 = arith.constant 0 : index
    %4 = vector.load %arg5[%c0_4, %c0_5, %c0_6] : memref<1x4x4225xf32, #tpu.memory_space<vmem>>, vector<1x4x4225xf32>
    %5 = vector.shape_cast %4 : vector<1x4x4225xf32> to vector<4x4225xf32>
    %6 = vector.shape_cast %3 : vector<4x4225xf32> to vector<1x4x4225xf32>
    tpu.vector_store %arg5[%c0_4, %c0_5, %c0_6], %6 {strides = array<i32>} : memref<1x4x4225xf32, #tpu.memory_space<vmem>>, vector<1x4x4225xf32>,
    return
  }
  func.func @transform_0(%arg0: i32, %arg1: i32, %arg2: i32) -> (i32, i32) {
    %c0_i32 = arith.constant 0 : i32
    return %arg0, %arg1 : i32, i32
  }
  func.func @transform_1(%arg0: i32, %arg1: i32, %arg2: i32) -> (i32, i32, i32) {
    %c0_i32 = arith.constant 0 : i32
    return %arg2, %arg0, %arg1 : i32, i32, i32
  }
  func.func @transform_2(%arg0: i32, %arg1: i32, %arg2: i32) -> (i32, i32, i32) {
    %c0_i32 = arith.constant 0 : i32
    return %arg2, %arg0, %arg1 : i32, i32, i32
  }
}

</mosaic_0001>

<llo_original>
// kernel: tpu_custom_call.1
$region0: #{tpu_custom_call.1}
  #allocation0 [shape = 'u32[]', space=smem, size = 0x4, offset = 0x4, fixed_abs, tag = 'smem constant byte address 0x4 - core index']
  #allocation1 [shape = 'u32[72,128]{1,0:T(1,128)}', space=vmem, size = 0x9000, scoped, tag = 'internal scratch']
  %s0 = inlined_call_operand.vmem [shape: f32[4,4225], index: 0, kind: input, shape index: {}]
  %s1 = inlined_call_operand.hbm [shape: f32[2,4,4225], index: 1, kind: input, shape index: {}, may-alias: {1,2}]
  %s2 = inlined_call_operand.hbm [shape: f32[2,4,4225], index: 2, kind: output, shape index: {}, may-alias: {1,2}]
  %s3 = sld [smem:[#allocation0]]
  $region45: #{tpu_custom_call.1} parent=0
    _
  %s5 = ssub.s32 1, %s3
  %s6 = scalar_select 0, %s5, %s3
  $region1: #{tpu_custom_call.1} parent=0
    #allocation2 [shape = 'u8[139264]{0}', space=vmem, size = 0x22000, scoped, tag = 'input window, operand 1']
    #allocation3 [shape = 's32[2]{0}', space=sflag, size = 0x8, scoped, tag = 'scoped memory for tpu_custom_call.1']
    #allocation4 [shape = 's32[2]{0}', space=sflag, size = 0x8, scoped, tag = 'scoped memory for tpu_custom_call.1']
    #allocation5 [shape = 'u8[139264]{0}', space=vmem, size = 0x22000, scoped, tag = 'output window, operand 0']
    %7 = vsyncpa [#allocation3], 0
    %s8 = scalar_lea.sflag [#allocation3], 1
    %9 = vsyncpa %s8, 0
    %10 = vsyncpa [#allocation4], 0
    %s11 = scalar_lea.sflag [#allocation4], 1
    %12 = vsyncpa %s11, 0
    loop: start=0, step=1, limit=4
    $region2: #{tpu_custom_call.1} parent=1 // loop_pre_header
      _
    $region3: #{tpu_custom_call.1} parent=1 // loop_header
      %s14 = sphi 0, %s18
      %p15 = scmp.ge.s32.totalorder %s14, 4
      %s21 = sphi 0, %s40
      %s22 = sphi 0, %s36
      %s23 = sphi 0, %s32
      %s24 = sphi 0, %s21
      %s25 = sphi 0, %s22
      %s26 = sphi 0, %s23
      %s27 = sphi 0, %s24
      %s28 = sphi 0, %s25
      %s29 = sphi 0, %s26
      %s45 = sphi 0, %s47
      %s48 = sphi 0, %s45
      %s49 = sphi 0, %s48
      %s65 = sphi 0, %s49
      %s75 = sphi 0, %s77
      %s78 = sphi 0, %s75
      %s79 = sphi 0, %s78
      %s95 = sphi 0, %s79
      %s105 = sphi 0, %s107
      %s108 = sphi 0, %s105
      %s109 = sphi 0, %s108
      %s125 = sphi 0, %s109
    $region4: #{tpu_custom_call.1} parent=1 // loop_header_branch
      %17 = sbr.rel (%p15) target = $region8
    $region5: #{tpu_custom_call.1} parent=1 // loop_body
      %s19 = ssub.s32 %s14, 1
      %s20 = ssub.s32 %s14, 2
      %s30 = sadd.s32 1, %s23
      %p31 = scmp.ge.s32.totalorder %s30, 2
      %s32 = scalar_select %p31, 0, %s30
      %s33 = sadd.s32 1, %s22
      %s34 = scalar_select %p31, %s33, %s22
      %p35 = scmp.ge.s32.totalorder %s34, 1
      %s36 = scalar_select %p35, 0, %s34
      %s37 = sadd.s32 1, %s21
      %s38 = scalar_select %p35, %s37, %s21
      %p39 = scmp.ge.s32.totalorder %s38, 1
      %s40 = scalar_select %p39, 0, %s38
      %s41 = ssub.s32 %s21, %s40
      %s42 = ssub.s32 %s22, %s36
      %s43 = sor.u32 %s41, %s42
      %p44 = scmp.eq.s32.totalorder %s43, 0
      %s46 = sadd.s32 %s45, 1
      %s47 = scalar_select %p44, %s45, %s46
      %p50 = pneg %p44
      %p51 = scmp.eq.s32.totalorder %s14, 1
      %p52 = por %p50, %p51
      %p53 = scmp.ne.s32.totalorder %s45, %s48
      %p54 = scmp.eq.s32.totalorder %s14, 0
      %p55 = por %p53, %p54
      %p56 = scmp.ne.s32.totalorder %s45, %s48
      %p57 = scmp.eq.s32.totalorder %s19, 1
      %p58 = por %p56, %p57
      %p59 = scmp.ne.s32.totalorder %s48, %s49
      %p60 = scmp.eq.s32.totalorder %s19, 0
      %p61 = por %p59, %p60
      %p62 = scmp.ne.s32.totalorder %s48, %s49
      %p63 = scmp.eq.s32.totalorder %s20, 1
      %p64 = por %p62, %p63
      %p66 = scmp.ne.s32.totalorder %s49, %s65
      %p67 = scmp.eq.s32.totalorder %s20, 0
      %p68 = por %p66, %p67
      %s69 = ssub.s32 %s23, %s32
      %s70 = ssub.s32 %s21, %s40
      %s71 = sor.u32 %s69, %s70
      %s72 = ssub.s32 %s22, %s36
      %s73 = sor.u32 %s71, %s72
      %p74 = scmp.eq.s32.totalorder %s73, 0
      %s76 = sadd.s32 %s75, 1
      %s77 = scalar_select %p74, %s75, %s76
      %p80 = pneg %p74
      %p81 = scmp.eq.s32.totalorder %s14, 1
      %p82 = por %p80, %p81
      %p83 = scmp.ne.s32.totalorder %s75, %s78
      %p84 = scmp.eq.s32.totalorder %s14, 0
      %p85 = por %p83, %p84
      %p86 = scmp.ne.s32.totalorder %s75, %s78
      %p87 = scmp.eq.s32.totalorder %s19, 1
      %p88 = por %p86, %p87
      %p89 = scmp.ne.s32.totalorder %s78, %s79
      %p90 = scmp.eq.s32.totalorder %s19, 0
      %p91 = por %p89, %p90
      %p92 = scmp.ne.s32.totalorder %s78, %s79
      %p93 = scmp.eq.s32.totalorder %s20, 1
      %p94 = por %p92, %p93
      %p96 = scmp.ne.s32.totalorder %s79, %s95
      %p97 = scmp.eq.s32.totalorder %s20, 0
      %p98 = por %p96, %p97
      %s99 = ssub.s32 %s23, %s32
      %s100 = ssub.s32 %s21, %s40
      %s101 = sor.u32 %s99, %s100
      %s102 = ssub.s32 %s22, %s36
      %s103 = sor.u32 %s101, %s102
      %p104 = scmp.eq.s32.totalorder %s103, 0
      %s106 = sadd.s32 %s105, 1
      %s107 = scalar_select %p104, %s105, %s106
      %p110 = pneg %p104
      %p111 = scmp.eq.s32.totalorder %s14, 1
      %p112 = por %p110, %p111
      %p113 = scmp.ne.s32.totalorder %s105, %s108
      %p114 = scmp.eq.s32.totalorder %s14, 0
      %p115 = por %p113, %p114
      %p116 = scmp.ne.s32.totalorder %s105, %s108
      %p117 = scmp.eq.s32.totalorder %s19, 1
      %p118 = por %p116, %p117
      %p119 = scmp.ne.s32.totalorder %s108, %s109
      %p120 = scmp.eq.s32.totalorder %s19, 0
      %p121 = por %p119, %p120
      %p122 = scmp.ne.s32.totalorder %s108, %s109
      %p123 = scmp.eq.s32.totalorder %s20, 1
      %p124 = por %p122, %p123
      %p126 = scmp.ne.s32.totalorder %s109, %s125
      %p127 = scmp.eq.s32.totalorder %s20, 0
      %p128 = por %p126, %p127
      %p129 = scmp.le.s32.totalorder 1, %s14
      %p130 = scmp.lt.s32.totalorder %s14, 3
      %p131 = pnand %p129, %p130
      %p132 = pneg %p131
      // Predicated region
      $region9: #{tpu_custom_call.1} parent=5 // pred_check
        _
      $region10: #{tpu_custom_call.1} parent=5 // pred_check_branch
        %134 = sbr.rel (%p131) target = $region12
      $region11: #{tpu_custom_call.1} parent=5 // pred_region
        %s135 = ssub.s32 %s14, 1
        // Predicated region
        $region13: #{tpu_custom_call.1} parent=11 // pred_check
          %p136 = pneg %p61
        $region14: #{tpu_custom_call.1} parent=11 // pred_check_branch
          %138 = sbr.rel (%p136) target = $region16
        $region15: #{tpu_custom_call.1} parent=11 // pred_region
          %s139 = smul.u32 34, %s25
          %p140 = scmp.lt.s32.totalorder %s24, 0
          %s141 = scalar_select %p140, %s24, 0
          %p142 = scmp.lt.s32.totalorder %s139, 33
          %s143 = scalar_select %p142, %s139, 33
          %s144 = smul.addr %s141, 34
          %s145 = sadd.s32 %s143, %s144
          %s146 = smul.addr %s145, 4
          %s147 = scalar_lea.vmem %s0, %s146
          %s148 = smul.u32 34, %s25
        $region16: #{tpu_custom_call.1} parent=11 // pred_fallthru
          _
      $region12: #{tpu_custom_call.1} parent=5 // pred_fallthru
        _
      %p149 = scmp.lt.s32.totalorder %s14, 2
      // Predicated region
      $region17: #{tpu_custom_call.1} parent=5 // pred_check
        %p150 = pneg %p149
      $region18: #{tpu_custom_call.1} parent=5 // pred_check_branch
        %152 = sbr.rel (%p150) target = $region20
      $region19: #{tpu_custom_call.1} parent=5 // pred_region
        // Predicated region
        $region21: #{tpu_custom_call.1} parent=19 // pred_check
          %p153 = pneg %p85
        $region22: #{tpu_custom_call.1} parent=19 // pred_check_branch
          %155 = sbr.rel (%p153) target = $region24
        $region23: #{tpu_custom_call.1} parent=19 // pred_region
          %s156 = sand.u32 %s75, 1
          %s157 = scalar_lea.sflag [#allocation3], %s156
          %s158 = sand.u32 %s75, 1
          %s159 = smul.addr %s158, 136
          %s160 = scalar_lea.vmem [#allocation2], %s159
          %s161 = smul.u32 34, %s22
          %163 = vsyncadd %s157, 0
          %s164 = smul.addr %s21, 34
          %s165 = sadd.s32 %s161, %s164
          %s166 = smul.addr %s23, 34
          %s167 = sadd.s32 %s165, %s166
          %s168 = smul.addr %s167, 4
          %s169 = scalar_lea.hbm %s1, %s168
          %s171 = sshll.u32 %s169, 4
          %s172 = int_to_ptr.hbm [resolvable:$true] %s171
          %s173 = sshll.u32 %s160, 4
          %s174 = int_to_ptr.vmem [resolvable:$true] %s173
          %176 = dma.hbm_to_vmem [thread:$0]  %s172, 2176, %s174, %s157
        $region24: #{tpu_custom_call.1} parent=19 // pred_fallthru
          _
      $region20: #{tpu_custom_call.1} parent=5 // pred_fallthru
        _
      %p177 = scmp.le.s32.totalorder 1, %s14
      %p178 = scmp.lt.s32.totalorder %s14, 3
      %p179 = pnand %p177, %p178
      %p180 = pneg %p179
      // Predicated region
      $region25: #{tpu_custom_call.1} parent=5 // pred_check
        _
      $region26: #{tpu_custom_call.1} parent=5 // pred_check_branch
        %182 = sbr.rel (%p179) target = $region28
      $region27: #{tpu_custom_call.1} parent=5 // pred_region
        %s183 = ssub.s32 %s14, 1
        %s184 = sand.u32 %s78, 1
        %s185 = scalar_lea.sflag [#allocation3], %s184
        %s186 = sand.u32 %s78, 1
        %s187 = smul.addr %s186, 136
        %s188 = scalar_lea.vmem [#allocation2], %s187
        // Predicated region
        $region29: #{tpu_custom_call.1} parent=27 // pred_check
          %p189 = pneg %p91
        $region30: #{tpu_custom_call.1} parent=27 // pred_check_branch
          %191 = sbr.rel (%p189) target = $region32
        $region31: #{tpu_custom_call.1} parent=27 // pred_region
          %193 = dma.done %s185, 2176
        $region32: #{tpu_custom_call.1} parent=27 // pred_fallthru
          _
        %s194 = smul.u32 34, %s25
        %p195 = scmp.lt.s32.totalorder %s24, 0
        %s196 = scalar_select %p195, %s24, 0
        %p197 = scmp.lt.s32.totalorder %s194, 33
        %s198 = scalar_select %p197, %s194, 33
        %s199 = smul.addr %s196, 34
        %s200 = sadd.s32 %s198, %s199
        %s201 = smul.addr %s200, 4
        %s202 = scalar_lea.vmem %s0, %s201
        %p203 = pneg %p61
        %p204 = pneg %p58
        %s205 = sand.u32 %s78, 1
        %s206 = scalar_lea.sflag [#allocation3], %s205
        %s207 = sand.u32 %s78, 1
        %s208 = smul.addr %s207, 136
        %s209 = scalar_lea.vmem [#allocation2], %s208
        %p210 = pneg %p91
        %p211 = pneg %p88
        %p212 = pneg %p121
        %p213 = pneg %p118
        %s214 = sand.u32 %s108, 1
        %s215 = scalar_lea.sflag [#allocation4], %s214
        %s216 = sand.u32 %s108, 1
        %s217 = smul.addr %s216, 136
        %s218 = scalar_lea.vmem [#allocation5], %s217
        %s219 = smul.u32 34, %s25
        %p220 = scmp.lt.s32.totalorder %s24, 0
        %s221 = scalar_select %p220, %s24, 0
        %p222 = scmp.lt.s32.totalorder %s219, 33
        %s223 = scalar_select %p222, %s219, 33
        %s224 = smul.addr %s221, 34
        %s225 = sadd.s32 %s223, %s224
        %s226 = smul.addr %s225, 4
        %s227 = scalar_lea.vmem %s0, %s226
        %s228 = smul.u32 34, %s25
        %s229 = smul.u32 34, %s25
        %s230 = smul.u32 34, %s25
        %v231 = vld [vmem:[%s188] sm:$0xff]
        %v232 = vld [vmem:[%s188 + $0x8] sm:$0xff]
        %v233 = vld [vmem:[%s188 + $0x10] sm:$0xff]
        %v234 = vld [vmem:[%s188 + $0x18] sm:$0xff]
        %v235 = vld [vmem:[%s188 + $0x20] sm:$0xff]
        %v236 = vld [vmem:[%s188 + $0x28] sm:$0xff]
        %v237 = vld [vmem:[%s188 + $0x30] sm:$0xff]
        %v238 = vld [vmem:[%s188 + $0x38] sm:$0xff]
        %v239 = vld [vmem:[%s188 + $0x40] sm:$0xff]
        %v240 = vld [vmem:[%s188 + $0x48] sm:$0xff]
        %v241 = vld [vmem:[%s188 + $0x50] sm:$0xff]
        %v242 = vld [vmem:[%s188 + $0x58] sm:$0xff]
        %v243 = vld [vmem:[%s188 + $0x60] sm:$0xff]
        %v244 = vld [vmem:[%s188 + $0x68] sm:$0xff]
        %v245 = vld [vmem:[%s188 + $0x70] sm:$0xff]
        %v246 = vld [vmem:[%s188 + $0x78] sm:$0xff]
        %v247 = vld [vmem:[%s188 + $0x80] sm:$0xff]
        %v248 = vld [vmem:[%s227] sm:$0xff]
        %v249 = vld [vmem:[%s227 + $0x8] sm:$0xff]
        %v250 = vld [vmem:[%s227 + $0x10] sm:$0xff]
        %v251 = vld [vmem:[%s227 + $0x18] sm:$0xff]
        %v252 = vld [vmem:[%s227 + $0x20] sm:$0xff]
        %v253 = vld [vmem:[%s227 + $0x28] sm:$0xff]
        %v254 = vld [vmem:[%s227 + $0x30] sm:$0xff]
        %v255 = vld [vmem:[%s227 + $0x38] sm:$0xff]
        %v256 = vld [vmem:[%s227 + $0x40] sm:$0xff]
        %v257 = vld [vmem:[%s227 + $0x48] sm:$0xff]
        %v258 = vld [vmem:[%s227 + $0x50] sm:$0xff]
        %v259 = vld [vmem:[%s227 + $0x58] sm:$0xff]
        %v260 = vld [vmem:[%s227 + $0x60] sm:$0xff]
        %v261 = vld [vmem:[%s227 + $0x68] sm:$0xff]
        %v262 = vld [vmem:[%s227 + $0x70] sm:$0xff]
        %v263 = vld [vmem:[%s227 + $0x78] sm:$0xff]
        %v264 = vld [vmem:[%s227 + $0x80] sm:$0xff]
        %v265 = vadd.f32 %v231, %v248
        %v266 = vadd.f32 %v232, %v249
        %v267 = vadd.f32 %v233, %v250
        %v268 = vadd.f32 %v234, %v251
        %v269 = vadd.f32 %v235, %v252
        %v270 = vadd.f32 %v236, %v253
        %v271 = vadd.f32 %v237, %v254
        %v272 = vadd.f32 %v238, %v255
        %v273 = vadd.f32 %v239, %v256
        %v274 = vadd.f32 %v240, %v257
        %v275 = vadd.f32 %v241, %v258
        %v276 = vadd.f32 %v242, %v259
        %v277 = vadd.f32 %v243, %v260
        %v278 = vadd.f32 %v244, %v261
        %v279 = vadd.f32 %v245, %v262
        %v280 = vadd.f32 %v246, %v263
        %v281 = vadd.f32 %v247, %v264
        %282 = vst [vmem:[%s218] sm:$0xff] %v265
        %283 = vst [vmem:[%s218 + $0x8] sm:$0xff] %v266
        %284 = vst [vmem:[%s218 + $0x10] sm:$0xff] %v267
        %285 = vst [vmem:[%s218 + $0x18] sm:$0xff] %v268
        %286 = vst [vmem:[%s218 + $0x20] sm:$0xff] %v269
        %287 = vst [vmem:[%s218 + $0x28] sm:$0xff] %v270
        %288 = vst [vmem:[%s218 + $0x30] sm:$0xff] %v271
        %289 = vst [vmem:[%s218 + $0x38] sm:$0xff] %v272
        %290 = vst [vmem:[%s218 + $0x40] sm:$0xff] %v273
        %291 = vst [vmem:[%s218 + $0x48] sm:$0xff] %v274
        %292 = vst [vmem:[%s218 + $0x50] sm:$0xff] %v275
        %293 = vst [vmem:[%s218 + $0x58] sm:$0xff] %v276
        %294 = vst [vmem:[%s218 + $0x60] sm:$0xff] %v277
        %295 = vst [vmem:[%s218 + $0x68] sm:$0xff] %v278
        %296 = vst [vmem:[%s218 + $0x70] sm:$0xff] %v279
        %297 = vst [vmem:[%s218 + $0x78] sm:$0xff] %v280
        %vm298 = vcmask 1043456
        %vm299 = vcmask 7172
        %vm300 = vmor %vm299, %vm298
        %301 = vst.msk [vmem:[%s218 + $0x80] sm:$0xff] %vm300, %v281
        %s302 = sand.u32 %s108, 1
        %s303 = scalar_lea.sflag [#allocation4], %s302
        %s304 = sand.u32 %s108, 1
        %s305 = smul.addr %s304, 136
        %s306 = scalar_lea.vmem [#allocation5], %s305
        // Predicated region
        $region33: #{tpu_custom_call.1} parent=27 // pred_check
          %p307 = pneg %p118
        $region34: #{tpu_custom_call.1} parent=27 // pred_check_branch
          %309 = sbr.rel (%p307) target = $region36
        $region35: #{tpu_custom_call.1} parent=27 // pred_region
          %s310 = smul.u32 34, %s25
          %312 = vsyncadd %s303, 0
          %s313 = smul.addr %s24, 34
          %s314 = sadd.s32 %s310, %s313
          %s315 = smul.addr %s26, 34
          %s316 = sadd.s32 %s314, %s315
          %s317 = smul.addr %s316, 4
          %s318 = scalar_lea.hbm %s2, %s317
          %s320 = sshll.u32 %s306, 4
          %s321 = int_to_ptr.vmem [resolvable:$true] %s320
          %s322 = sshll.u32 %s318, 4
          %s323 = int_to_ptr.hbm [resolvable:$true] %s322
          %325 = dma.vmem_to_hbm [thread:$0]  %s321, 2176, %s323, %s303
        $region36: #{tpu_custom_call.1} parent=27 // pred_fallthru
          _
      $region28: #{tpu_custom_call.1} parent=5 // pred_fallthru
        _
      %p326 = scmp.le.s32.totalorder 2, %s14
      // Predicated region
      $region37: #{tpu_custom_call.1} parent=5 // pred_check
        %p327 = pneg %p326
      $region38: #{tpu_custom_call.1} parent=5 // pred_check_branch
        %329 = sbr.rel (%p327) target = $region40
      $region39: #{tpu_custom_call.1} parent=5 // pred_region
        %s330 = ssub.s32 %s14, 2
        // Predicated region
        $region41: #{tpu_custom_call.1} parent=39 // pred_check
          %p331 = pneg %p124
        $region42: #{tpu_custom_call.1} parent=39 // pred_check_branch
          %333 = sbr.rel (%p331) target = $region44
        $region43: #{tpu_custom_call.1} parent=39 // pred_region
          %s334 = sand.u32 %s109, 1
          %s335 = scalar_lea.sflag [#allocation4], %s334
          %s336 = sand.u32 %s109, 1
          %s337 = smul.addr %s336, 136
          %s338 = scalar_lea.vmem [#allocation5], %s337
          %340 = dma.done %s335, 2176
        $region44: #{tpu_custom_call.1} parent=39 // pred_fallthru
          _
      $region40: #{tpu_custom_call.1} parent=5 // pred_fallthru
        _
    $region6: #{tpu_custom_call.1} parent=1 // loop_footer
      %s18 = sadd.s32 1, %s14
    $region7: #{tpu_custom_call.1} parent=1 // loop_footer_branch
      %13 = sbr.rel target = $region3
    $region8: #{tpu_custom_call.1} parent=1 // loop_exit
      _
    %341 = vsyncpa [#allocation3], 1
    %s342 = scalar_lea.sflag [#allocation3], 1
    %343 = vsyncpa %s342, 1
    %344 = vsyncpa [#allocation4], 1
    %s345 = scalar_lea.sflag [#allocation4], 1
    %346 = vsyncpa %s345, 1

</llo_original>
